<compile_context>
chip_gen: v6e
topology: v6e:2x2x1
jax: 0.10.0
libtpu: 0.0.40
codegen_flags: <defaults>
</compile_context>

<pallas_src>
import functools

import jax
import jax.numpy as jnp
from jax import lax
from jax.experimental import pallas as pl
from jax.experimental.pallas import tpu as pltpu

EPS = 1e-5


def _round_up(x, m):
    return (x + m - 1) // m * m


# ---------------------------------------------------------------------------
# Pass 1: conv-as-matmul (K-tiled, f32 VMEM accumulator) + BN partial sums.
# ---------------------------------------------------------------------------
def conv_stats_kernel(p_ref, w_ref, y_ref, stats_ref, acc_ref):
    kk = pl.program_id(1)

    @pl.when(kk == 0)
    def _():
        acc_ref[...] = jnp.zeros_like(acc_ref)

    acc_ref[...] += jnp.dot(p_ref[...], w_ref[...],
                            preferred_element_type=jnp.float32)

    @pl.when(kk == pl.num_programs(1) - 1)
    def _():
        y = acc_ref[...]                                  # (TILE_M, COUT_P) f32
        y_ref[...] = y.astype(y_ref.dtype)
        s = jnp.sum(y, axis=0, keepdims=True)             # (1, COUT_P)
        ss = jnp.sum(y * y, axis=0, keepdims=True)        # (1, COUT_P)
        stats_ref[...] = jnp.concatenate([s, ss], axis=0).reshape(stats_ref.shape)


# ---------------------------------------------------------------------------
# Pass 2: folded BatchNorm (y*scale + shift) + ReLU on lane-dense tiles.
# ---------------------------------------------------------------------------
def bn_relu_kernel(y_ref, scale_ref, shift_ref, o_ref):
    y = y_ref[...]
    o_ref[...] = jnp.maximum(y * scale_ref[...] + shift_ref[...], 0.0).astype(o_ref.dtype)


def _im2col_3d(x_pad, out_d, out_h, out_w, ksize=4, stride=2):
    """Extract conv patches via strided slicing (pure layout glue, no conv op)."""
    # TODO(synk): fuse reflect-pad + patch extraction into the matmul kernel to
    # avoid materializing the 8x-inflated im2col tensor in HBM.
    n, cin = x_pad.shape[0], x_pad.shape[1]
    cols = []
    for kd in range(ksize):
        for kh in range(ksize):
            for kw in range(ksize):
                cols.append(
                    x_pad[:, :,
                          kd:kd + stride * out_d:stride,
                          kh:kh + stride * out_h:stride,
                          kw:kw + stride * out_w:stride])
    p = jnp.stack(cols, axis=2)                      # (N, Cin, k^3, Do, Ho, Wo)
    p = jnp.transpose(p, (0, 3, 4, 5, 1, 2))         # (N, Do, Ho, Wo, Cin, k^3)
    return p.reshape(n * out_d * out_h * out_w, cin * ksize ** 3)


@jax.jit
def block2_forward(x, weight, gamma, beta):
    """x: (N, Cin, D, H, W); weight: (Cout, Cin, 4, 4, 4) -> (N, Cout, D/2, H/2, W/2)."""
    n, cin, d, h, w = x.shape
    cout = weight.shape[0]
    out_d, out_h, out_w = d // 2, h // 2, w // 2

    # Reflect padding (pad=1 per spatial side) == padding_mode='reflect'.
    x_pad = jnp.pad(x, ((0, 0), (0, 0), (1, 1), (1, 1), (1, 1)), mode="reflect")

    patches = _im2col_3d(x_pad, out_d, out_h, out_w)          # (M, K) f32
    m, k = patches.shape

    # Lane/sublane friendly padded sizes + tile sizes (sized for v7x 64 MiB VMEM).
    cout_p = _round_up(cout, 128)                 # lane-dense output channels
    tile_m = min(512, _round_up(m, 8))            # rows per tile (sublane axis)
    tile_k = min(512, _round_up(k, 128))          # reduction tile
    m_p = _round_up(m, tile_m)
    k_p = _round_up(k, tile_k)
    n_m, n_k = m_p // tile_m, k_p // tile_k

    # MXU operands in bf16 (accumulation stays f32 inside the kernel).
    patches_p = jnp.zeros((m_p, k_p), jnp.bfloat16).at[:m, :k].set(
        patches.astype(jnp.bfloat16))
    w_mat = weight.reshape(cout, cin * 64).T.astype(jnp.bfloat16)     # (K, Cout)
    w_p = jnp.zeros((k_p, cout_p), jnp.bfloat16).at[:k, :cout].set(w_mat)

    # ---------------- pass 1: conv matmul + BN partial sums ----------------
    y_conv, stats = pl.pallas_call(
        conv_stats_kernel,
        out_shape=(jax.ShapeDtypeStruct((m_p, cout_p), jnp.float32),
                   jax.ShapeDtypeStruct((n_m, 2, cout_p), jnp.float32)),
        grid_spec=pltpu.PrefetchScalarGridSpec(
            num_scalar_prefetch=0,
            grid=(n_m, n_k),
            in_specs=[
                pl.BlockSpec((tile_m, tile_k), lambda i, kk: (i, kk)),
                pl.BlockSpec((tile_k, cout_p), lambda i, kk: (kk, 0)),
            ],
            out_specs=(
                pl.BlockSpec((tile_m, cout_p), lambda i, kk: (i, 0)),
                pl.BlockSpec((1, 2, cout_p), lambda i, kk: (i, 0, 0)),
            ),
            scratch_shapes=[pltpu.VMEM((tile_m, cout_p), jnp.float32)]),
        compiler_params=pltpu.CompilerParams(
            dimension_semantics=("parallel", "arbitrary"),
            vmem_limit_bytes=48 * 1024 * 1024),
        cost_estimate=pl.CostEstimate(
            flops=2 * m_p * k_p * cout_p,
            transcendentals=0,
            bytes_accessed=(patches_p.size * 2 + w_p.size * 2
                            + m_p * cout_p * 4 + n_m * 2 * cout_p * 4)),
    )(patches_p, w_p)

    # --- tiny per-channel reduction + folded BN affine (pure JAX, O(Cout)) ---
    sums = jnp.sum(stats, axis=0)                        # (2, cout_p)
    mean = sums[0] / m                                   # true (unpadded) M
    var = jnp.maximum(sums[1] / m - mean * mean, 0.0)    # biased (training) var
    gamma_p = jnp.zeros((cout_p,), jnp.float32).at[:cout].set(gamma)
    beta_p = jnp.zeros((cout_p,), jnp.float32).at[:cout].set(beta)
    scale = gamma_p * lax.rsqrt(var + EPS)
    shift = beta_p - mean * scale

    # ---------------- pass 2: relu(y*scale + shift) -------------------------
    out_flat = pl.pallas_call(
        bn_relu_kernel,
        out_shape=jax.ShapeDtypeStruct((m_p, cout_p), jnp.float32),
        grid_spec=pltpu.PrefetchScalarGridSpec(
            num_scalar_prefetch=0,
            grid=(n_m,),
            in_specs=[
                pl.BlockSpec((tile_m, cout_p), lambda i: (i, 0)),
                pl.BlockSpec((1, cout_p), lambda i: (0, 0)),
                pl.BlockSpec((1, cout_p), lambda i: (0, 0)),
            ],
            out_specs=pl.BlockSpec((tile_m, cout_p), lambda i: (i, 0))),
        compiler_params=pltpu.CompilerParams(
            dimension_semantics=("parallel",),
            vmem_limit_bytes=48 * 1024 * 1024),
    )(y_conv, scale.reshape(1, cout_p), shift.reshape(1, cout_p))

    # Strip padding; convert channels-last back to NCDHW only at the boundary.
    out = out_flat[:m, :cout].reshape(n, out_d, out_h, out_w, cout)
    return jnp.transpose(out, (0, 4, 1, 2, 3))


def _reference(x, weight, gamma, beta):
    """Pure-JAX f32 reference for validation."""
    x_pad = jnp.pad(x, ((0, 0), (0, 0), (1, 1), (1, 1), (1, 1)), mode="reflect")
    y = lax.conv_general_dilated(
        x_pad, weight, window_strides=(2, 2, 2), padding="VALID",
        dimension_numbers=("NCDHW", "OIDHW", "NCDHW"))
    mean = jnp.mean(y, axis=(0, 2, 3, 4), keepdims=True)
    var = jnp.mean((y - mean) ** 2, axis=(0, 2, 3, 4), keepdims=True)
    y = (y - mean) * lax.rsqrt(var + EPS)
    y = y * gamma.reshape(1, -1, 1, 1, 1) + beta.reshape(1, -1, 1, 1, 1)
    return jnp.maximum(y, 0.0)


if __name__ == "__main__":
    key = jax.random.PRNGKey(0)
    k_x, k_w = jax.random.split(key)

    N, Cin, Cout = 2, 4, 8
    D = H = W = 8

    x = jax.random.normal(k_x, (N, Cin, D, H, W), dtype=jnp.float32)

    # Conv3d weight (Cout, Cin, 4, 4, 4), kaiming_normal_ fan_in / relu:
    # std = sqrt(2 / fan_in), fan_in = Cin * 4 * 4 * 4.
    fan_in = Cin * 4 * 4 * 4
    w = jax.random.normal(k_w, (Cout, Cin, 4, 4, 4), dtype=jnp.float32) * jnp.sqrt(2.0 / fan_in)

    # BatchNorm3d default affine params.
    gamma = jnp.ones((Cout,), dtype=jnp.float32)
    beta = jnp.zeros((Cout,), dtype=jnp.float32)

    out = jax.block_until_ready(block2_forward(x, w, gamma, beta))
    ref = _reference(x, w, gamma, beta)

    assert out.shape == (N, Cout, D // 2, H // 2, W // 2), out.shape
    # MXU operands are bf16 (f32 accumulation); compare with bf16-appropriate tolerance.
    err = float(jnp.max(jnp.abs(out - ref)))
    assert err < 3e-2, err

    print("KERNEL_OK")
</pallas_src>

<mosaic_0001>
module attributes {stable_mosaic.version = 11 : i64} {
  func.func @conv_stats_kernel(%arg0: i32, %arg1: i32, %arg2: memref<128x256xbf16, #tpu.memory_space<vmem>>, %arg3: memref<256x128xbf16, #tpu.memory_space<vmem>>, %arg4: memref<128x128xf32, #tpu.memory_space<vmem>>, %arg5: memref<1x2x128xf32, #tpu.memory_space<vmem>>, %arg6: memref<128x128xf32, #tpu.memory_space<vmem>>) attributes {dimension_semantics = [#tpu.dimension_semantics<parallel>, #tpu.dimension_semantics<arbitrary>], iteration_bounds = array<i64: 1, 1>, scalar_prefetch = 0 : i64, scratch_operands = 1 : i64, tpu.core_type = #tpu.core_type<tc>, window_params = [{transform_indices = @transform_0, window_bounds = array<i64: 128, 256>}, {transform_indices = @transform_1, window_bounds = array<i64: 256, 128>}, {transform_indices = @transform_2, window_bounds = array<i64: 128, 128>}, {transform_indices = @transform_3, window_bounds = array<i64: 1, 2, 128>}]} {
    %c0_i32 = arith.constant 0 : i32
    %0 = arith.cmpi eq, %arg1, %c0_i32 : i32
    %1 = arith.extui %0 : i1 to i32
    %c0_i32_0 = arith.constant 0 : i32
    %2 = arith.cmpi ne, %1, %c0_i32_0 : i32
    scf.if %2 {
      %cst_10 = arith.constant 0.000000e+00 : f32
      %12 = vector.broadcast %cst_10 : f32 to vector<128x128xf32>
      %c0_11 = arith.constant 0 : index
      %c0_12 = arith.constant 0 : index
      %13 = vector.load %arg6[%c0_11, %c0_12] : memref<128x128xf32, #tpu.memory_space<vmem>>, vector<128x128xf32>
      tpu.vector_store %arg6[%c0_11, %c0_12], %12 {strides = array<i32>} : memref<128x128xf32, #tpu.memory_space<vmem>>, vector<128x128xf32>,
    } else {
    }
    %c0 = arith.constant 0 : index
    %c0_1 = arith.constant 0 : index
    %3 = vector.load %arg6[%c0, %c0_1] : memref<128x128xf32, #tpu.memory_space<vmem>>, vector<128x128xf32>
    %c0_2 = arith.constant 0 : index
    %c0_3 = arith.constant 0 : index
    %4 = vector.load %arg2[%c0_2, %c0_3] : memref<128x256xbf16, #tpu.memory_space<vmem>>, vector<128x256xbf16>
    %c0_4 = arith.constant 0 : index
    %c0_5 = arith.constant 0 : index
    %5 = vector.load %arg3[%c0_4, %c0_5] : memref<256x128xbf16, #tpu.memory_space<vmem>>, vector<256x128xbf16>
    %cst = arith.constant dense<0.000000e+00> : vector<128x128xf32>
    %6 = tpu.matmul %4, %5, %cst {dimension_numbers = #tpu.dot_dimension_numbers<[1], [0], [0], [1], [0, 0, 1, 1], [], []>} : vector<128x256xbf16>, vector<256x128xbf16>, vector<128x128xf32> -> vector<128x128xf32>
    %7 = arith.addf %3, %6 : vector<128x128xf32>
    %c0_6 = arith.constant 0 : index
    %c0_7 = arith.constant 0 : index
    %8 = vector.load %arg6[%c0_6, %c0_7] : memref<128x128xf32, #tpu.memory_space<vmem>>, vector<128x128xf32>
    tpu.vector_store %arg6[%c0_6, %c0_7], %7 {strides = array<i32>} : memref<128x128xf32, #tpu.memory_space<vmem>>, vector<128x128xf32>,
    %c0_i32_8 = arith.constant 0 : i32
    %9 = arith.cmpi eq, %arg1, %c0_i32_8 : i32
    %10 = arith.extui %9 : i1 to i32
    %c0_i32_9 = arith.constant 0 : i32
    %11 = arith.cmpi ne, %10, %c0_i32_9 : i32
    scf.if %11 {
      %c0_10 = arith.constant 0 : index
      %c0_11 = arith.constant 0 : index
      %12 = vector.load %arg6[%c0_10, %c0_11] : memref<128x128xf32, #tpu.memory_space<vmem>>, vector<128x128xf32>
      %c0_12 = arith.constant 0 : index
      %c0_13 = arith.constant 0 : index
      %13 = vector.load %arg4[%c0_12, %c0_13] : memref<128x128xf32, #tpu.memory_space<vmem>>, vector<128x128xf32>
      tpu.vector_store %arg4[%c0_12, %c0_13], %12 {strides = array<i32>} : memref<128x128xf32, #tpu.memory_space<vmem>>, vector<128x128xf32>,
      %cst_14 = arith.constant dense<0.000000e+00> : vector<128xf32>
      %14 = vector.multi_reduction <add>, %12, %cst_14 [0] : vector<128x128xf32> to vector<128xf32>
      %15 = vector.shape_cast %14 : vector<128xf32> to vector<1x128xf32>
      %16 = arith.mulf %12, %12 : vector<128x128xf32>
      %cst_15 = arith.constant dense<0.000000e+00> : vector<128xf32>
      %17 = vector.multi_reduction <add>, %16, %cst_15 [0] : vector<128x128xf32> to vector<128xf32>
      %18 = vector.shape_cast %17 : vector<128xf32> to vector<1x128xf32>
      %19 = tpu.concatenate %15, %18 in 0 : vector<1x128xf32>, vector<1x128xf32> -> vector<2x128xf32>
      %20 = vector.shape_cast %19 : vector<2x128xf32> to vector<1x2x128xf32>
      %c0_16 = arith.constant 0 : index
      %c0_17 = arith.constant 0 : index
      %c0_18 = arith.constant 0 : index
      %21 = vector.load %arg5[%c0_16, %c0_17, %c0_18] : memref<1x2x128xf32, #tpu.memory_space<vmem>>, vector<1x2x128xf32>
      tpu.vector_store %arg5[%c0_16, %c0_17, %c0_18], %20 {strides = array<i32>} : memref<1x2x128xf32, #tpu.memory_space<vmem>>, vector<1x2x128xf32>,
    } else {
    }
    return
  }
  func.func @transform_0(%arg0: i32, %arg1: i32) -> (i32, i32) {
    %c0_i32 = arith.constant 0 : i32
    return %arg0, %arg1 : i32, i32
  }
  func.func @transform_1(%arg0: i32, %arg1: i32) -> (i32, i32) {
    %c0_i32 = arith.constant 0 : i32
    %c0_i32_0 = arith.constant 0 : i32
    return %arg1, %c0_i32 : i32, i32
  }
  func.func @transform_2(%arg0: i32, %arg1: i32) -> (i32, i32) {
    %c0_i32 = arith.constant 0 : i32
    %c0_i32_0 = arith.constant 0 : i32
    return %arg0, %c0_i32 : i32, i32
  }
  func.func @transform_3(%arg0: i32, %arg1: i32) -> (i32, i32, i32) {
    %c0_i32 = arith.constant 0 : i32
    %c0_i32_0 = arith.constant 0 : i32
    %c0_i32_1 = arith.constant 0 : i32
    return %arg0, %c0_i32, %c0_i32_0 : i32, i32, i32
  }
}

module attributes {stable_mosaic.version = 11 : i64} {
  func.func @bn_relu_kernel(%arg0: i32, %arg1: memref<128x128xf32, #tpu.memory_space<vmem>>, %arg2: memref<1x128xf32, #tpu.memory_space<vmem>>, %arg3: memref<1x128xf32, #tpu.memory_space<vmem>>, %arg4: memref<128x128xf32, #tpu.memory_space<vmem>>) attributes {dimension_semantics = [#tpu.dimension_semantics<parallel>], iteration_bounds = array<i64: 1>, scalar_prefetch = 0 : i64, scratch_operands = 0 : i64, tpu.core_type = #tpu.core_type<tc>, window_params = [{transform_indices = @transform_0, window_bounds = array<i64: 128, 128>}, {pipeline_mode = #tpu.pipeline_mode<synchronous>, transform_indices = @transform_1, window_bounds = array<i64: 1, 128>}, {pipeline_mode = #tpu.pipeline_mode<synchronous>, transform_indices = @transform_2, window_bounds = array<i64: 1, 128>}, {transform_indices = @transform_3, window_bounds = array<i64: 128, 128>}]} {
    %c0 = arith.constant 0 : index
    %c0_0 = arith.constant 0 : index
    %0 = vector.load %arg1[%c0, %c0_0] : memref<128x128xf32, #tpu.memory_space<vmem>>, vector<128x128xf32>
    %c0_1 = arith.constant 0 : index
    %c0_2 = arith.constant 0 : index
    %1 = vector.load %arg2[%c0_1, %c0_2] : memref<1x128xf32, #tpu.memory_space<vmem>>, vector<1x128xf32>
    %2 = vector.broadcast %1 : vector<1x128xf32> to vector<128x128xf32>
    %3 = arith.mulf %0, %2 : vector<128x128xf32>
    %c0_3 = arith.constant 0 : index
    %c0_4 = arith.constant 0 : index
    %4 = vector.load %arg3[%c0_3, %c0_4] : memref<1x128xf32, #tpu.memory_space<vmem>>, vector<1x128xf32>
    %5 = vector.broadcast %4 : vector<1x128xf32> to vector<128x128xf32>
    %6 = arith.addf %3, %5 : vector<128x128xf32>
    %cst = arith.constant 0.000000e+00 : f32
    %7 = vector.broadcast %cst : f32 to vector<128x128xf32>
    %8 = arith.maximumf %6, %7 : vector<128x128xf32>
    %c0_5 = arith.constant 0 : index
    %c0_6 = arith.constant 0 : index
    %9 = vector.load %arg4[%c0_5, %c0_6] : memref<128x128xf32, #tpu.memory_space<vmem>>, vector<128x128xf32>
    tpu.vector_store %arg4[%c0_5, %c0_6], %8 {strides = array<i32>} : memref<128x128xf32, #tpu.memory_space<vmem>>, vector<128x128xf32>,
    return
  }
  func.func @transform_0(%arg0: i32) -> (i32, i32) {
    %c0_i32 = arith.constant 0 : i32
    %c0_i32_0 = arith.constant 0 : i32
    return %arg0, %c0_i32 : i32, i32
  }
  func.func @transform_1(%arg0: i32) -> (i32, i32) {
    %c0_i32 = arith.constant 0 : i32
    %c0_i32_0 = arith.constant 0 : i32
    %c0_i32_1 = arith.constant 0 : i32
    return %c0_i32, %c0_i32_0 : i32, i32
  }
  func.func @transform_2(%arg0: i32) -> (i32, i32) {
    %c0_i32 = arith.constant 0 : i32
    %c0_i32_0 = arith.constant 0 : i32
    %c0_i32_1 = arith.constant 0 : i32
    return %c0_i32, %c0_i32_0 : i32, i32
  }
  func.func @transform_3(%arg0: i32) -> (i32, i32) {
    %c0_i32 = arith.constant 0 : i32
    %c0_i32_0 = arith.constant 0 : i32
    return %arg0, %c0_i32 : i32, i32
  }
}

</mosaic_0001>

<llo_original>
// kernel: block2_forward.3
$region0: #{block2_forward.3}
  #allocation0 [shape = 'u32[]', space=smem, size = 0x4, offset = 0x4, fixed_abs, tag = 'smem constant byte address 0x4 - core index']
  #allocation1 [shape = 'u32[144,128]{1,0:T(1,128)}', space=vmem, size = 0x12000, scoped, tag = 'internal scratch']
  %s0 = inlined_call_operand.vmem [shape: f32[128,128], index: 0, kind: input, shape index: {}]
  %s1 = inlined_call_operand.vmem [shape: f32[1,128], index: 1, kind: input, shape index: {}]
  %s2 = inlined_call_operand.vmem [shape: f32[1,128], index: 2, kind: input, shape index: {}]
  %s3 = inlined_call_operand.hbm [shape: f32[128,128], index: 3, kind: output, shape index: {}]
  %s4 = sld [smem:[#allocation0]]
  $region22: #{block2_forward.3} parent=0
    _
  %s6 = ssub.s32 1, %s4
  %s7 = scalar_select 0, %s6, %s4
  $region1: #{block2_forward.3} parent=0
    #allocation2 [shape = 'u8[65536]{0}', space=vmem, size = 0x10000, scoped, tag = 'output window, operand 0, single buffered']
    #allocation3 [shape = 's32[1]{0}', space=sflag, size = 0x4, scoped, tag = 'scoped memory for block2_forward.3']
    %8 = vsyncpa [#allocation3], 0
    // Predicated region
    $region2: #{block2_forward.3} parent=1 // pred_check
      _
    $region3: #{block2_forward.3} parent=1 // pred_check_branch
      %10 = sbr.rel (0) target = $region5
    $region4: #{block2_forward.3} parent=1 // pred_region
      _
    $region5: #{block2_forward.3} parent=1 // pred_fallthru
      _
    // Predicated region
    $region6: #{block2_forward.3} parent=1 // pred_check
      _
    $region7: #{block2_forward.3} parent=1 // pred_check_branch
      %12 = sbr.rel (0) target = $region9
    $region8: #{block2_forward.3} parent=1 // pred_region
      _
    $region9: #{block2_forward.3} parent=1 // pred_fallthru
      _
    // Predicated region
    $region10: #{block2_forward.3} parent=1 // pred_check
      _
    $region11: #{block2_forward.3} parent=1 // pred_check_branch
      %14 = sbr.rel (0) target = $region13
    $region12: #{block2_forward.3} parent=1 // pred_region
      _
    $region13: #{block2_forward.3} parent=1 // pred_fallthru
      _
    %v15 = vld [vmem:[%s0] sm:$0xff]
    %v16 = vld [vmem:[%s0 + $0x8] sm:$0xff]
    %v17 = vld [vmem:[%s0 + $0x10] sm:$0xff]
    %v18 = vld [vmem:[%s0 + $0x18] sm:$0xff]
    %v19 = vld [vmem:[%s0 + $0x20] sm:$0xff]
    %v20 = vld [vmem:[%s0 + $0x28] sm:$0xff]
    %v21 = vld [vmem:[%s0 + $0x30] sm:$0xff]
    %v22 = vld [vmem:[%s0 + $0x38] sm:$0xff]
    %v23 = vld [vmem:[%s0 + $0x40] sm:$0xff]
    %v24 = vld [vmem:[%s0 + $0x48] sm:$0xff]
    %v25 = vld [vmem:[%s0 + $0x50] sm:$0xff]
    %v26 = vld [vmem:[%s0 + $0x58] sm:$0xff]
    %v27 = vld [vmem:[%s0 + $0x60] sm:$0xff]
    %v28 = vld [vmem:[%s0 + $0x68] sm:$0xff]
    %v29 = vld [vmem:[%s0 + $0x70] sm:$0xff]
    %v30 = vld [vmem:[%s0 + $0x78] sm:$0xff]
    %v31 = vld [vmem:[%s1] sm:$0x1]
    %v33 = vlaneseq
    %v34 = vshrl.u32 %v33, 7
    %v35 = vsub.s32 0, %v34
    %v36 = vrot.slane %v31, %v35
    %v38 = vmul.f32 %v15, %v36
    %v39 = vmul.f32 %v16, %v36
    %v40 = vmul.f32 %v17, %v36
    %v41 = vmul.f32 %v18, %v36
    %v42 = vmul.f32 %v19, %v36
    %v43 = vmul.f32 %v20, %v36
    %v44 = vmul.f32 %v21, %v36
    %v45 = vmul.f32 %v22, %v36
    %v46 = vmul.f32 %v23, %v36
    %v47 = vmul.f32 %v24, %v36
    %v48 = vmul.f32 %v25, %v36
    %v49 = vmul.f32 %v26, %v36
    %v50 = vmul.f32 %v27, %v36
    %v51 = vmul.f32 %v28, %v36
    %v52 = vmul.f32 %v29, %v36
    %v53 = vmul.f32 %v30, %v36
    %v54 = vld [vmem:[%s2] sm:$0x1]
    %v56 = vlaneseq
    %v57 = vshrl.u32 %v56, 7
    %v58 = vsub.s32 0, %v57
    %v59 = vrot.slane %v54, %v58
    %v61 = vadd.f32 %v38, %v59
    %v62 = vadd.f32 %v39, %v59
    %v63 = vadd.f32 %v40, %v59
    %v64 = vadd.f32 %v41, %v59
    %v65 = vadd.f32 %v42, %v59
    %v66 = vadd.f32 %v43, %v59
    %v67 = vadd.f32 %v44, %v59
    %v68 = vadd.f32 %v45, %v59
    %v69 = vadd.f32 %v46, %v59
    %v70 = vadd.f32 %v47, %v59
    %v71 = vadd.f32 %v48, %v59
    %v72 = vadd.f32 %v49, %v59
    %v73 = vadd.f32 %v50, %v59
    %v74 = vadd.f32 %v51, %v59
    %v75 = vadd.f32 %v52, %v59
    %v76 = vadd.f32 %v53, %v59
    %v77 = vmax.f32 %v61, 0.0
    %v78 = vmax.f32 %v62, 0.0
    %v79 = vmax.f32 %v63, 0.0
    %v80 = vmax.f32 %v64, 0.0
    %v81 = vmax.f32 %v65, 0.0
    %v82 = vmax.f32 %v66, 0.0
    %v83 = vmax.f32 %v67, 0.0
    %v84 = vmax.f32 %v68, 0.0
    %v85 = vmax.f32 %v69, 0.0
    %v86 = vmax.f32 %v70, 0.0
    %v87 = vmax.f32 %v71, 0.0
    %v88 = vmax.f32 %v72, 0.0
    %v89 = vmax.f32 %v73, 0.0
    %v90 = vmax.f32 %v74, 0.0
    %v91 = vmax.f32 %v75, 0.0
    %v92 = vmax.f32 %v76, 0.0
    %93 = vst [vmem:[#allocation2] sm:$0xff] %v77
    %94 = vst [vmem:[#allocation2 + $0x8] sm:$0xff] %v78
    %95 = vst [vmem:[#allocation2 + $0x10] sm:$0xff] %v79
    %96 = vst [vmem:[#allocation2 + $0x18] sm:$0xff] %v80
    %97 = vst [vmem:[#allocation2 + $0x20] sm:$0xff] %v81
    %98 = vst [vmem:[#allocation2 + $0x28] sm:$0xff] %v82
    %99 = vst [vmem:[#allocation2 + $0x30] sm:$0xff] %v83
    %100 = vst [vmem:[#allocation2 + $0x38] sm:$0xff] %v84
    %101 = vst [vmem:[#allocation2 + $0x40] sm:$0xff] %v85
    %102 = vst [vmem:[#allocation2 + $0x48] sm:$0xff] %v86
    %103 = vst [vmem:[#allocation2 + $0x50] sm:$0xff] %v87
    %104 = vst [vmem:[#allocation2 + $0x58] sm:$0xff] %v88
    %105 = vst [vmem:[#allocation2 + $0x60] sm:$0xff] %v89
    %106 = vst [vmem:[#allocation2 + $0x68] sm:$0xff] %v90
    %107 = vst [vmem:[#allocation2 + $0x70] sm:$0xff] %v91
    %108 = vst [vmem:[#allocation2 + $0x78] sm:$0xff] %v92
    // Predicated region
    $region14: #{block2_forward.3} parent=1 // pred_check
      _
    $region15: #{block2_forward.3} parent=1 // pred_check_branch
      %110 = sbr.rel (0) target = $region17
    $region16: #{block2_forward.3} parent=1 // pred_region
      %s112 = ssub.s32 2048, 2048
      %113 = vsyncadd [#allocation3], %s112
      %s114 = sshll.u32 [#allocation2], 4
      %s115 = int_to_ptr.vmem [resolvable:$true] %s114
      %120 = dma.vmem_to_hbm [thread:$0]  %s115, 2048, %s3, [#allocation3], 128, 128, 8
    $region17: #{block2_forward.3} parent=1 // pred_fallthru
      _
    // Predicated region
    $region18: #{block2_forward.3} parent=1 // pred_check
      _
    $region19: #{block2_forward.3} parent=1 // pred_check_branch
      %122 = sbr.rel (0) target = $region21
    $region20: #{block2_forward.3} parent=1 // pred_region
      %123 = dma.done [#allocation3], 2048
    $region21: #{block2_forward.3} parent=1 // pred_fallthru
      _
    %124 = vsyncpa [#allocation3], 1

// kernel: block2_forward.2
$region0: #{block2_forward.2}
  #allocation0 [shape = 'u32[]', space=smem, size = 0x4, offset = 0x4, fixed_abs, tag = 'smem constant byte address 0x4 - core index']
  #allocation1 [shape = 'u32[144,128]{1,0:T(1,128)}', space=vmem, size = 0x12000, scoped, tag = 'internal scratch']
  #allocation2 [shape = 'f32[128,128]{1,0:T(8,128)}', space=vmem, size = 0x10000, scoped, tag = 'scratch operand']
  %s0 = inlined_call_operand.vmem [shape: bf16[128,256], index: 0, kind: input, shape index: {}]
  %s1 = inlined_call_operand.vmem [shape: bf16[256,128], index: 1, kind: input, shape index: {}]
  %s2 = inlined_call_operand.vmem [shape: f32[128,128], index: 2, kind: output, shape index: {0}]
  %s3 = inlined_call_operand.vmem [shape: f32[1,2,128], index: 3, kind: output, shape index: {1}]
  %4 = xla_tuple %s2, %s3
  %s5 = sld [smem:[#allocation0]]
  $region34: #{block2_forward.2} parent=0
    _
  %s7 = ssub.s32 1, %s5
  %s8 = scalar_select 0, %s7, %s5
  // Predicated region
  $region2: #{block2_forward.2} parent=0 // pred_check
    _
  $region3: #{block2_forward.2} parent=0 // pred_check_branch
    %10 = sbr.rel (0) target = $region5
  $region4: #{block2_forward.2} parent=0 // pred_region
    _
  $region5: #{block2_forward.2} parent=0 // pred_fallthru
    _
  // Predicated region
  $region6: #{block2_forward.2} parent=0 // pred_check
    _
  $region7: #{block2_forward.2} parent=0 // pred_check_branch
    %12 = sbr.rel (0) target = $region9
  $region8: #{block2_forward.2} parent=0 // pred_region
    _
  $region9: #{block2_forward.2} parent=0 // pred_fallthru
    _
  %p14 = scmp.eq.s32.totalorder 0, 0
  // Predicated region
  $region10: #{block2_forward.2} parent=0 // pred_check
    %p15 = pneg %p14
  $region11: #{block2_forward.2} parent=0 // pred_check_branch
    %17 = sbr.rel (%p15) target = $region13
  $region12: #{block2_forward.2} parent=0 // pred_region
    %18 = vst [vmem:[#allocation2] sm:$0xff] 0.0
    %19 = vst [vmem:[#allocation2 + $0x8] sm:$0xff] 0.0
    %20 = vst [vmem:[#allocation2 + $0x10] sm:$0xff] 0.0
    %21 = vst [vmem:[#allocation2 + $0x18] sm:$0xff] 0.0
    %22 = vst [vmem:[#allocation2 + $0x20] sm:$0xff] 0.0
    %23 = vst [vmem:[#allocation2 + $0x28] sm:$0xff] 0.0
    %24 = vst [vmem:[#allocation2 + $0x30] sm:$0xff] 0.0
    %25 = vst [vmem:[#allocation2 + $0x38] sm:$0xff] 0.0
    %26 = vst [vmem:[#allocation2 + $0x40] sm:$0xff] 0.0
    %27 = vst [vmem:[#allocation2 + $0x48] sm:$0xff] 0.0
    %28 = vst [vmem:[#allocation2 + $0x50] sm:$0xff] 0.0
    %29 = vst [vmem:[#allocation2 + $0x58] sm:$0xff] 0.0
    %30 = vst [vmem:[#allocation2 + $0x60] sm:$0xff] 0.0
    %31 = vst [vmem:[#allocation2 + $0x68] sm:$0xff] 0.0
    %32 = vst [vmem:[#allocation2 + $0x70] sm:$0xff] 0.0
    %33 = vst [vmem:[#allocation2 + $0x78] sm:$0xff] 0.0
  $region13: #{block2_forward.2} parent=0 // pred_fallthru
    _
  %v34 = vld [vmem:[#allocation2] sm:$0xff]
  %v35 = vld [vmem:[#allocation2 + $0x8] sm:$0xff]
  %v36 = vld [vmem:[#allocation2 + $0x10] sm:$0xff]
  %v37 = vld [vmem:[#allocation2 + $0x18] sm:$0xff]
  %v38 = vld [vmem:[#allocation2 + $0x20] sm:$0xff]
  %v39 = vld [vmem:[#allocation2 + $0x28] sm:$0xff]
  %v40 = vld [vmem:[#allocation2 + $0x30] sm:$0xff]
  %v41 = vld [vmem:[#allocation2 + $0x38] sm:$0xff]
  %v42 = vld [vmem:[#allocation2 + $0x40] sm:$0xff]
  %v43 = vld [vmem:[#allocation2 + $0x48] sm:$0xff]
  %v44 = vld [vmem:[#allocation2 + $0x50] sm:$0xff]
  %v45 = vld [vmem:[#allocation2 + $0x58] sm:$0xff]
  %v46 = vld [vmem:[#allocation2 + $0x60] sm:$0xff]
  %v47 = vld [vmem:[#allocation2 + $0x68] sm:$0xff]
  %v48 = vld [vmem:[#allocation2 + $0x70] sm:$0xff]
  %v49 = vld [vmem:[#allocation2 + $0x78] sm:$0xff]
  %v50 = vld [vmem:[%s0] sm:$0xff]
  %v51 = vld [vmem:[%s0 + $0x8] sm:$0xff]
  %v52 = vld [vmem:[%s0 + $0x10] sm:$0xff]
  %v53 = vld [vmem:[%s0 + $0x18] sm:$0xff]
  %v54 = vld [vmem:[%s0 + $0x20] sm:$0xff]
  %v55 = vld [vmem:[%s0 + $0x28] sm:$0xff]
  %v56 = vld [vmem:[%s0 + $0x30] sm:$0xff]
  %v57 = vld [vmem:[%s0 + $0x38] sm:$0xff]
  %v58 = vld [vmem:[%s0 + $0x40] sm:$0xff]
  %v59 = vld [vmem:[%s0 + $0x48] sm:$0xff]
  %v60 = vld [vmem:[%s0 + $0x50] sm:$0xff]
  %v61 = vld [vmem:[%s0 + $0x58] sm:$0xff]
  %v62 = vld [vmem:[%s0 + $0x60] sm:$0xff]
  %v63 = vld [vmem:[%s0 + $0x68] sm:$0xff]
  %v64 = vld [vmem:[%s0 + $0x70] sm:$0xff]
  %v65 = vld [vmem:[%s0 + $0x78] sm:$0xff]
  %v66 = vld [vmem:[%s1] sm:$0xf]
  %v67 = vld [vmem:[%s1 + $0x4] sm:$0xf]
  %v68 = vld [vmem:[%s1 + $0x8] sm:$0xf]
  %v69 = vld [vmem:[%s1 + $0xc] sm:$0xf]
  %v70 = vld [vmem:[%s1 + $0x10] sm:$0xf]
  %v71 = vld [vmem:[%s1 + $0x14] sm:$0xf]
  %v72 = vld [vmem:[%s1 + $0x18] sm:$0xf]
  %v73 = vld [vmem:[%s1 + $0x1c] sm:$0xf]
  %v74 = vld [vmem:[%s1 + $0x20] sm:$0xf]
  %v75 = vld [vmem:[%s1 + $0x24] sm:$0xf]
  %v76 = vld [vmem:[%s1 + $0x28] sm:$0xf]
  %v77 = vld [vmem:[%s1 + $0x2c] sm:$0xf]
  %v78 = vld [vmem:[%s1 + $0x30] sm:$0xf]
  %v79 = vld [vmem:[%s1 + $0x34] sm:$0xf]
  %v80 = vld [vmem:[%s1 + $0x38] sm:$0xf]
  %v81 = vld [vmem:[%s1 + $0x3c] sm:$0xf]
  %v82 = vld [vmem:[%s1 + $0x40] sm:$0xf]
  %v83 = vld [vmem:[%s1 + $0x44] sm:$0xf]
  %v84 = vld [vmem:[%s1 + $0x48] sm:$0xf]
  %v85 = vld [vmem:[%s1 + $0x4c] sm:$0xf]
  %v86 = vld [vmem:[%s1 + $0x50] sm:$0xf]
  %v87 = vld [vmem:[%s1 + $0x54] sm:$0xf]
  %v88 = vld [vmem:[%s1 + $0x58] sm:$0xf]
  %v89 = vld [vmem:[%s1 + $0x5c] sm:$0xf]
  %v90 = vld [vmem:[%s1 + $0x60] sm:$0xf]
  %v91 = vld [vmem:[%s1 + $0x64] sm:$0xf]
  %v92 = vld [vmem:[%s1 + $0x68] sm:$0xf]
  %v93 = vld [vmem:[%s1 + $0x6c] sm:$0xf]
  %v94 = vld [vmem:[%s1 + $0x70] sm:$0xf]
  %v95 = vld [vmem:[%s1 + $0x74] sm:$0xf]
  %v96 = vld [vmem:[%s1 + $0x78] sm:$0xf]
  %v97 = vld [vmem:[%s1 + $0x7c] sm:$0xf]
  %v114 = vunpack.c.l.b16 %v50
  %v115 = vunpack.c.h.b16 %v50
  %v116 = vunpack.c.l.b16 %v51
  %v117 = vunpack.c.h.b16 %v51
  %v118 = vunpack.c.l.b16 %v52
  %v119 = vunpack.c.h.b16 %v52
  %v120 = vunpack.c.l.b16 %v53
  %v121 = vunpack.c.h.b16 %v53
  %v122 = vunpack.c.l.b16 %v54
  %v123 = vunpack.c.h.b16 %v54
  %v124 = vunpack.c.l.b16 %v55
  %v125 = vunpack.c.h.b16 %v55
  %v126 = vunpack.c.l.b16 %v56
  %v127 = vunpack.c.h.b16 %v56
  %v128 = vunpack.c.l.b16 %v57
  %v129 = vunpack.c.h.b16 %v57
  %v130 = vunpack.c.l.b16 %v58
  %v131 = vunpack.c.h.b16 %v58
  %v132 = vunpack.c.l.b16 %v59
  %v133 = vunpack.c.h.b16 %v59
  %v134 = vunpack.c.l.b16 %v60
  %v135 = vunpack.c.h.b16 %v60
  %v136 = vunpack.c.l.b16 %v61
  %v137 = vunpack.c.h.b16 %v61
  %v138 = vunpack.c.l.b16 %v62
  %v139 = vunpack.c.h.b16 %v62
  %v140 = vunpack.c.l.b16 %v63
  %v141 = vunpack.c.h.b16 %v63
  %v142 = vunpack.c.l.b16 %v64
  %v143 = vunpack.c.h.b16 %v64
  %v144 = vunpack.c.l.b16 %v65
  %v145 = vunpack.c.h.b16 %v65
  %v146 = vpack.c.b16 %v116, %v114
  %v147 = vpack.c.b16 %v117, %v115
  %v148 = vpack.c.b16 %v120, %v118
  %v149 = vpack.c.b16 %v121, %v119
  %v150 = vpack.c.b16 %v124, %v122
  %v151 = vpack.c.b16 %v125, %v123
  %v152 = vpack.c.b16 %v128, %v126
  %v153 = vpack.c.b16 %v129, %v127
  %v154 = vpack.c.b16 %v132, %v130
  %v155 = vpack.c.b16 %v133, %v131
  %v156 = vpack.c.b16 %v136, %v134
  %v157 = vpack.c.b16 %v137, %v135
  %v158 = vpack.c.b16 %v140, %v138
  %v159 = vpack.c.b16 %v141, %v139
  %v160 = vpack.c.b16 %v144, %v142
  %v161 = vpack.c.b16 %v145, %v143
  %v210 = vunpack.c.l.b16 %v66
  %v211 = vunpack.c.l.b16 %v67
  %v212 = vunpack.c.l.b16 %v68
  %v213 = vunpack.c.l.b16 %v69
  %v214 = vunpack.c.l.b16 %v70
  %v215 = vunpack.c.l.b16 %v71
  %v216 = vunpack.c.l.b16 %v72
  %v217 = vunpack.c.l.b16 %v73
  %v218 = vunpack.c.l.b16 %v74
  %v219 = vunpack.c.l.b16 %v75
  %v220 = vunpack.c.l.b16 %v76
  %v221 = vunpack.c.l.b16 %v77
  %v222 = vunpack.c.l.b16 %v78
  %v223 = vunpack.c.l.b16 %v79
  %v224 = vunpack.c.l.b16 %v80
  %v225 = vunpack.c.l.b16 %v81
  %v226 = vunpack.c.l.b16 %v82
  %v227 = vunpack.c.l.b16 %v83
  %v228 = vunpack.c.l.b16 %v84
  %v229 = vunpack.c.l.b16 %v85
  %v230 = vunpack.c.l.b16 %v86
  %v231 = vunpack.c.l.b16 %v87
  %v232 = vunpack.c.l.b16 %v88
  %v233 = vunpack.c.l.b16 %v89
  %v234 = vunpack.c.l.b16 %v90
  %v235 = vunpack.c.l.b16 %v91
  %v236 = vunpack.c.l.b16 %v92
  %v237 = vunpack.c.l.b16 %v93
  %v238 = vunpack.c.l.b16 %v94
  %v239 = vunpack.c.l.b16 %v95
  %v240 = vunpack.c.l.b16 %v96
  %v241 = vunpack.c.l.b16 %v97
  %v242 = vpack.c.b16 %v211, %v210
  %v243 = vpack.c.b16 %v213, %v212
  %v244 = vpack.c.b16 %v215, %v214
  %v245 = vpack.c.b16 %v217, %v216
  %v246 = vpack.c.b16 %v219, %v218
  %v247 = vpack.c.b16 %v221, %v220
  %v248 = vpack.c.b16 %v223, %v222
  %v249 = vpack.c.b16 %v225, %v224
  %v250 = vpack.c.b16 %v227, %v226
  %v251 = vpack.c.b16 %v229, %v228
  %v252 = vpack.c.b16 %v231, %v230
  %v253 = vpack.c.b16 %v233, %v232
  %v254 = vpack.c.b16 %v235, %v234
  %v255 = vpack.c.b16 %v237, %v236
  %v256 = vpack.c.b16 %v239, %v238
  %v257 = vpack.c.b16 %v241, %v240
  %274 = vmatprep.subr.bf16.mxu0 0
  %275 = vmatpush1.bf16.msra.mxu0 %v249
  %276 = vmatprep.subr.bf16.mxu0 0
  %277 = vmatpush1.bf16.msra.mxu0 %v248
  %278 = vmatprep.subr.bf16.mxu0 0
  %279 = vmatpush1.bf16.msra.mxu0 %v247
  %280 = vmatprep.subr.bf16.mxu0 0
  %281 = vmatpush1.bf16.msra.mxu0 %v246
  %282 = vmatprep.subr.bf16.mxu0 0
  %283 = vmatpush1.bf16.msra.mxu0 %v245
  %284 = vmatprep.subr.bf16.mxu0 0
  %285 = vmatpush1.bf16.msra.mxu0 %v244
  %286 = vmatprep.subr.bf16.mxu0 0
  %287 = vmatpush1.bf16.msra.mxu0 %v243
  %288 = vmatprep.subr.bf16.mxu0 0
  %289 = vmatpush1.bf16.msra.mxu0 %v242
  %290 = vmatprep.subr.bf16.mxu0 0
  %291 = vmatpush2.bf16.msra.mxu0 %v257
  %292 = vmatprep.subr.bf16.mxu0 0
  %293 = vmatpush2.bf16.msra.mxu0 %v256
  %294 = vmatprep.subr.bf16.mxu0 0
  %295 = vmatpush2.bf16.msra.mxu0 %v255
  %296 = vmatprep.subr.bf16.mxu0 0
  %297 = vmatpush2.bf16.msra.mxu0 %v254
  %298 = vmatprep.subr.bf16.mxu0 0
  %299 = vmatpush2.bf16.msra.mxu0 %v253
  %300 = vmatprep.subr.bf16.mxu0 0
  %301 = vmatpush2.bf16.msra.mxu0 %v252
  %302 = vmatprep.subr.bf16.mxu0 0
  %303 = vmatpush2.bf16.msra.mxu0 %v251
  %304 = vmatprep.subr.bf16.mxu0 0
  %305 = vmatpush2.bf16.msra.mxu0 %v250
  %306 = vmatprep.mubr.bf16.mxu0 %v147
  %307 = vmatmul.mubr.bf16.gmra.mxu0 %v146
  %v308 = vpop.f32.mrf.mxu0
  %v309 = vadd.f32 0.0, %v308
  %v310 = vpop.f32.mrf.mxu0
  %v311 = vpop.f32.mrf.mxu0
  %v312 = vadd.f32 0.0, %v311
  %v313 = vpop.f32.mrf.mxu0
  %314 = vmatprep.mubr.bf16.mxu0 %v149
  %315 = vmatmul.mubr.bf16.gmra.mxu0 %v148
  %v316 = vpop.f32.mrf.mxu0
  %v317 = vadd.f32 0.0, %v316
  %v318 = vpop.f32.mrf.mxu0
  %v319 = vpop.f32.mrf.mxu0
  %v320 = vadd.f32 0.0, %v319
  %v321 = vpop.f32.mrf.mxu0
  %322 = vmatprep.mubr.bf16.mxu0 %v151
  %323 = vmatmul.mubr.bf16.gmra.mxu0 %v150
  %v324 = vpop.f32.mrf.mxu0
  %v325 = vadd.f32 0.0, %v324
  %v326 = vpop.f32.mrf.mxu0
  %v327 = vpop.f32.mrf.mxu0
  %v328 = vadd.f32 0.0, %v327
  %v329 = vpop.f32.mrf.mxu0
  %330 = vmatprep.mubr.bf16.mxu0 %v153
  %331 = vmatmul.mubr.bf16.gmra.mxu0 %v152
  %v332 = vpop.f32.mrf.mxu0
  %v333 = vadd.f32 0.0, %v332
  %v334 = vpop.f32.mrf.mxu0
  %v335 = vpop.f32.mrf.mxu0
  %v336 = vadd.f32 0.0, %v335
  %v337 = vpop.f32.mrf.mxu0
  %338 = vmatprep.mubr.bf16.mxu0 %v155
  %339 = vmatmul.mubr.bf16.gmra.mxu0 %v154
  %v340 = vpop.f32.mrf.mxu0
  %v341 = vadd.f32 0.0, %v340
  %v342 = vpop.f32.mrf.mxu0
  %v343 = vpop.f32.mrf.mxu0
  %v344 = vadd.f32 0.0, %v343
  %v345 = vpop.f32.mrf.mxu0
  %346 = vmatprep.mubr.bf16.mxu0 %v157
  %347 = vmatmul.mubr.bf16.gmra.mxu0 %v156
  %v348 = vpop.f32.mrf.mxu0
  %v349 = vadd.f32 0.0, %v348
  %v350 = vpop.f32.mrf.mxu0
  %v351 = vpop.f32.mrf.mxu0
  %v352 = vadd.f32 0.0, %v351
  %v353 = vpop.f32.mrf.mxu0
  %354 = vmatprep.mubr.bf16.mxu0 %v159
  %355 = vmatmul.mubr.bf16.gmra.mxu0 %v158
  %v356 = vpop.f32.mrf.mxu0
  %v357 = vadd.f32 0.0, %v356
  %v358 = vpop.f32.mrf.mxu0
  %v359 = vpop.f32.mrf.mxu0
  %v360 = vadd.f32 0.0, %v359
  %v361 = vpop.f32.mrf.mxu0
  %362 = vmatprep.mubr.bf16.mxu0 %v161
  %363 = vmatmul.mubr.bf16.gmra.mxu0 %v160
  %v364 = vpop.f32.mrf.mxu0
  %v365 = vadd.f32 0.0, %v364
  %v366 = vpop.f32.mrf.mxu0
  %v367 = vpop.f32.mrf.mxu0
  %v368 = vadd.f32 0.0, %v367
  %v369 = vpop.f32.mrf.mxu0
  %370 = vdwg.mxu0
  %v371 = vadd.f32 %v34, %v309
  %v372 = vadd.f32 %v35, %v312
  %v373 = vadd.f32 %v36, %v317
  %v374 = vadd.f32 %v37, %v320
  %v375 = vadd.f32 %v38, %v325
  %v376 = vadd.f32 %v39, %v328
  %v377 = vadd.f32 %v40, %v333
  %v378 = vadd.f32 %v41, %v336
  %v379 = vadd.f32 %v42, %v341
  %v380 = vadd.f32 %v43, %v344
  %v381 = vadd.f32 %v44, %v349
  %v382 = vadd.f32 %v45, %v352
  %v383 = vadd.f32 %v46, %v357
  %v384 = vadd.f32 %v47, %v360
  %v385 = vadd.f32 %v48, %v365
  %v386 = vadd.f32 %v49, %v368
  %387 = vst [vmem:[#allocation2] sm:$0xff] %v371
  %388 = vst [vmem:[#allocation2 + $0x8] sm:$0xff] %v372
  %389 = vst [vmem:[#allocation2 + $0x10] sm:$0xff] %v373
  %390 = vst [vmem:[#allocation2 + $0x18] sm:$0xff] %v374
  %391 = vst [vmem:[#allocation2 + $0x20] sm:$0xff] %v375
  %392 = vst [vmem:[#allocation2 + $0x28] sm:$0xff] %v376
  %393 = vst [vmem:[#allocation2 + $0x30] sm:$0xff] %v377
  %394 = vst [vmem:[#allocation2 + $0x38] sm:$0xff] %v378
  %395 = vst [vmem:[#allocation2 + $0x40] sm:$0xff] %v379
  %396 = vst [vmem:[#allocation2 + $0x48] sm:$0xff] %v380
  %397 = vst [vmem:[#allocation2 + $0x50] sm:$0xff] %v381
  %398 = vst [vmem:[#allocation2 + $0x58] sm:$0xff] %v382
  %399 = vst [vmem:[#allocation2 + $0x60] sm:$0xff] %v383
  %400 = vst [vmem:[#allocation2 + $0x68] sm:$0xff] %v384
  %401 = vst [vmem:[#allocation2 + $0x70] sm:$0xff] %v385
  %402 = vst [vmem:[#allocation2 + $0x78] sm:$0xff] %v386
  // Predicated region
  $region14: #{block2_forward.2} parent=0 // pred_check
    %p403 = pneg %p14
  $region15: #{block2_forward.2} parent=0 // pred_check_branch
    %405 = sbr.rel (%p403) target = $region17
  $region16: #{block2_forward.2} parent=0 // pred_region
    %v406 = vld [vmem:[#allocation2] sm:$0xff]
    %v407 = vld [vmem:[#allocation2 + $0x8] sm:$0xff]
    %v408 = vld [vmem:[#allocation2 + $0x10] sm:$0xff]
    %v409 = vld [vmem:[#allocation2 + $0x18] sm:$0xff]
    %v410 = vld [vmem:[#allocation2 + $0x20] sm:$0xff]
    %v411 = vld [vmem:[#allocation2 + $0x28] sm:$0xff]
    %v412 = vld [vmem:[#allocation2 + $0x30] sm:$0xff]
    %v413 = vld [vmem:[#allocation2 + $0x38] sm:$0xff]
    %v414 = vld [vmem:[#allocation2 + $0x40] sm:$0xff]
    %v415 = vld [vmem:[#allocation2 + $0x48] sm:$0xff]
    %v416 = vld [vmem:[#allocation2 + $0x50] sm:$0xff]
    %v417 = vld [vmem:[#allocation2 + $0x58] sm:$0xff]
    %v418 = vld [vmem:[#allocation2 + $0x60] sm:$0xff]
    %v419 = vld [vmem:[#allocation2 + $0x68] sm:$0xff]
    %v420 = vld [vmem:[#allocation2 + $0x70] sm:$0xff]
    %v421 = vld [vmem:[#allocation2 + $0x78] sm:$0xff]
    %422 = vst [vmem:[%s2] sm:$0xff] %v406
    %423 = vst [vmem:[%s2 + $0x8] sm:$0xff] %v407
    %424 = vst [vmem:[%s2 + $0x10] sm:$0xff] %v408
    %425 = vst [vmem:[%s2 + $0x18] sm:$0xff] %v409
    %426 = vst [vmem:[%s2 + $0x20] sm:$0xff] %v410
    %427 = vst [vmem:[%s2 + $0x28] sm:$0xff] %v411
    %428 = vst [vmem:[%s2 + $0x30] sm:$0xff] %v412
    %429 = vst [vmem:[%s2 + $0x38] sm:$0xff] %v413
    %430 = vst [vmem:[%s2 + $0x40] sm:$0xff] %v414
    %431 = vst [vmem:[%s2 + $0x48] sm:$0xff] %v415
    %432 = vst [vmem:[%s2 + $0x50] sm:$0xff] %v416
    %433 = vst [vmem:[%s2 + $0x58] sm:$0xff] %v417
    %434 = vst [vmem:[%s2 + $0x60] sm:$0xff] %v418
    %435 = vst [vmem:[%s2 + $0x68] sm:$0xff] %v419
    %436 = vst [vmem:[%s2 + $0x70] sm:$0xff] %v420
    %437 = vst [vmem:[%s2 + $0x78] sm:$0xff] %v421
    %v438 = vadd.f32 %v406, %v407
    %v439 = vadd.f32 %v438, %v408
    %v440 = vadd.f32 %v439, %v409
    %v441 = vadd.f32 %v440, %v410
    %v442 = vadd.f32 %v441, %v411
    %v443 = vadd.f32 %v442, %v412
    %v444 = vadd.f32 %v443, %v413
    %v445 = vadd.f32 %v444, %v414
    %v446 = vadd.f32 %v445, %v415
    %v447 = vadd.f32 %v446, %v416
    %v448 = vadd.f32 %v447, %v417
    %v449 = vadd.f32 %v448, %v418
    %v450 = vadd.f32 %v449, %v419
    %v451 = vadd.f32 %v450, %v420
    %v452 = vadd.f32 %v451, %v421
    %v453 = vrot.slane %v452, 4
    %v454 = vadd.f32 %v452, %v453
    %v455 = vrot.slane %v454, 2
    %v456 = vadd.f32 %v454, %v455
    %v457 = vrot.slane %v456, 1
    %v458 = vadd.f32 %v456, %v457
    %v459 = vmul.f32 %v406, %v406
    %v460 = vmul.f32 %v407, %v407
    %v461 = vmul.f32 %v408, %v408
    %v462 = vmul.f32 %v409, %v409
    %v463 = vmul.f32 %v410, %v410
    %v464 = vmul.f32 %v411, %v411
    %v465 = vmul.f32 %v412, %v412
    %v466 = vmul.f32 %v413, %v413
    %v467 = vmul.f32 %v414, %v414
    %v468 = vmul.f32 %v415, %v415
    %v469 = vmul.f32 %v416, %v416
    %v470 = vmul.f32 %v417, %v417
    %v471 = vmul.f32 %v418, %v418
    %v472 = vmul.f32 %v419, %v419
    %v473 = vmul.f32 %v420, %v420
    %v474 = vmul.f32 %v421, %v421
    %v475 = vadd.f32 %v459, %v460
    %v476 = vadd.f32 %v475, %v461
    %v477 = vadd.f32 %v476, %v462
    %v478 = vadd.f32 %v477, %v463
    %v479 = vadd.f32 %v478, %v464
    %v480 = vadd.f32 %v479, %v465
    %v481 = vadd.f32 %v480, %v466
    %v482 = vadd.f32 %v481, %v467
    %v483 = vadd.f32 %v482, %v468
    %v484 = vadd.f32 %v483, %v469
    %v485 = vadd.f32 %v484, %v470
    %v486 = vadd.f32 %v485, %v471
    %v487 = vadd.f32 %v486, %v472
    %v488 = vadd.f32 %v487, %v473
    %v489 = vadd.f32 %v488, %v474
    %v490 = vrot.slane %v489, 4
    %v491 = vadd.f32 %v489, %v490
    %v492 = vrot.slane %v491, 2
    %v493 = vadd.f32 %v491, %v492
    %v494 = vrot.slane %v493, 1
    %v495 = vadd.f32 %v493, %v494
    %vm496 = vcmask 1040384
    %v497 = vsel %vm496, %v458, %v495
    %498 = vst [vmem:[%s3] sm:$0x3] %v497
  $region17: #{block2_forward.2} parent=0 // pred_fallthru
    _
  // Predicated region
  $region18: #{block2_forward.2} parent=0 // pred_check
    _
  $region19: #{block2_forward.2} parent=0 // pred_check_branch
    %500 = sbr.rel (0) target = $region21
  $region20: #{block2_forward.2} parent=0 // pred_region
    _
  $region21: #{block2_forward.2} parent=0 // pred_fallthru
    _
  // Predicated region
  $region22: #{block2_forward.2} parent=0 // pred_check
    _
  $region23: #{block2_forward.2} parent=0 // pred_check_branch
    %502 = sbr.rel (0) target = $region25
  $region24: #{block2_forward.2} parent=0 // pred_region
    _
  $region25: #{block2_forward.2} parent=0 // pred_fallthru
    _
  // Predicated region
  $region26: #{block2_forward.2} parent=0 // pred_check
    _
  $region27: #{block2_forward.2} parent=0 // pred_check_branch
    %504 = sbr.rel (0) target = $region29
  $region28: #{block2_forward.2} parent=0 // pred_region
    _
  $region29: #{block2_forward.2} parent=0 // pred_fallthru
    _
  // Predicated region
  $region30: #{block2_forward.2} parent=0 // pred_check
    _
  $region31: #{block2_forward.2} parent=0 // pred_check_branch
    %506 = sbr.rel (0) target = $region33
  $region32: #{block2_forward.2} parent=0 // pred_region
    _
  $region33: #{block2_forward.2} parent=0 // pred_fallthru
    _

</llo_original>
